<compile_context>
chip_gen: v7x
topology: tpu7x:2x2x1
jax: 0.10.0
libtpu: 0.0.40
codegen_flags: <defaults>
</compile_context>

<pallas_src>
import jax
import jax.numpy as jnp
import numpy as np
from jax.experimental import pallas as pl
from jax.experimental.pallas import tpu as pltpu


# ---------------------------------------------------------------------------
# Kernel
# ---------------------------------------------------------------------------
def _neumf_kernel(
    uidx_ref, iidx_ref,          # (1, TB) int32 user / item index rows
    rhs_u_ref, rhs_i_ref,        # (E+H1, NUp), (E+H1, NIp)  fused, transposed tables
    b1_ref,                      # (H1, 1)  fc1 bias column
    w2t_ref,                     # (H2, H1) fc2 weight, transposed
    b2_ref,                      # (H2, 1)  fc2 bias column
    wm_ref,                      # (H2, 1)  MLP head weight column, pre-scaled by wf1
    head_ref,                    # SMEM (1,) f32: folded output bias bf'
    out_ref,                     # (1, 1, TB) f32 output row
):
    f32 = jnp.float32
    tb = uidx_ref.shape[1]
    nu = rhs_u_ref.shape[1]
    ni = rhs_i_ref.shape[1]
    h1_dim = b1_ref.shape[0]
    emb = rhs_u_ref.shape[0] - h1_dim

    # ---- Transposed one-hot gather (rows = table index, columns = batch) ----
    u_oh = jnp.where(
        jax.lax.broadcasted_iota(jnp.int32, (nu, tb), 0) == uidx_ref[...], 1.0, 0.0)
    i_oh = jnp.where(
        jax.lax.broadcasted_iota(jnp.int32, (ni, tb), 0) == iidx_ref[...], 1.0, 0.0)

    # One matmul per side gathers GMF rows (head-scaled) and fc1 outputs at once.
    u_res = jnp.dot(rhs_u_ref[...], u_oh, preferred_element_type=f32)   # (E+H1, TB)
    i_res = jnp.dot(rhs_i_ref[...], i_oh, preferred_element_type=f32)   # (E+H1, TB)

    # ---- GMF branch (wg * wf0 already folded into the user table rows) ----
    gmf_rows = u_res[:emb, :] * i_res[:emb, :]                          # (E, TB)

    # ---- MLP branch (fc1 folded into tables; fc2 on the MXU) ----
    h1 = jnp.maximum(u_res[emb:, :] + i_res[emb:, :] + b1_ref[...], 0.0)        # (H1, TB)
    h2 = jnp.maximum(
        jnp.dot(w2t_ref[...], h1, preferred_element_type=f32) + b2_ref[...], 0.0)  # (H2, TB)

    # ---- Lane-dense epilogue: sublane reduces produce a (1, TB) row directly ----
    z = (jnp.sum(gmf_rows, axis=0, keepdims=True)
         + jnp.sum(h2 * wm_ref[...], axis=0, keepdims=True)
         + head_ref[0])                                                 # (1, TB)
    y = 1.0 / (1.0 + jnp.exp(-z))                                       # sigmoid on TB/128 vregs
    out_ref[0] = y


# ---------------------------------------------------------------------------
# Wrapper
# ---------------------------------------------------------------------------
def _round_up(x, m):
    return (x + m - 1) // m * m


def _pad_rows(tab, multiple):
    n = tab.shape[0]
    n_pad = _round_up(n, multiple)
    if n_pad == n:
        return tab
    return jnp.pad(tab, ((0, n_pad - n), (0, 0)))


def neumf_forward(user_input, item_input, params, *, tile_b=2048):
    # tile_b: sweep per chip; 2048-4096 on v5e/v6e (128 MiB VMEM), 1024-2048 on v7x.
    assert tile_b % 128 == 0, "tile_b must be a multiple of 128 (lane-dense output)"
    batch = user_input.shape[0]

    f32 = jnp.float32
    emb = params["gmf_user_emb"].shape[1]
    h1 = params["w1"].shape[1]
    h2 = params["w2"].shape[1]
    assert emb % 8 == 0 and h1 % 8 == 0 and h2 % 8 == 0

    # ---- Batch tiling: 128-multiple tiles; prefer >= 2 tiles so v7x's 2 TCs both work ----
    b_pad = _round_up(batch, 128)
    if b_pad <= tile_b:
        tb = 128 if b_pad <= 128 else _round_up(-(-b_pad // 2), 128)
    else:
        tb = tile_b
    b_pad = _round_up(b_pad, tb)
    num_tiles = b_pad // tb

    # Index rows (padded slots reuse index 0, a valid row; results are sliced off).
    uidx = jnp.pad(user_input.astype(jnp.int32), (0, b_pad - batch)).reshape(1, b_pad)
    iidx = jnp.pad(item_input.astype(jnp.int32), (0, b_pad - batch)).reshape(1, b_pad)

    # ---- Fold head scalars + fc1 into the tables (pure wrapper-side algebra) ----
    wf = params["wf"].astype(f32)
    wf0, wf1 = wf[0, 0], wf[1, 0]
    hi = jax.lax.Precision.HIGHEST

    gu = params["gmf_user_emb"].astype(f32) * (params["wg"][:, 0].astype(f32) * wf0)
    gi = params["gmf_item_emb"].astype(f32)
    au = jnp.dot(params["mlp_user_emb"].astype(f32),
                 params["w1"][:emb, :].astype(f32), precision=hi)       # (NU, H1)
    ai = jnp.dot(params["mlp_item_emb"].astype(f32),
                 params["w1"][emb:, :].astype(f32), precision=hi)       # (NI, H1)

    # Per-side fused RHS, rows padded to 128 (padded one-hot rows never match),
    # then transposed so the kernel's activations are (features, batch).
    rhs_u = _pad_rows(jnp.concatenate([gu, au], axis=1), 128).T         # (E+H1, NUp)
    rhs_i = _pad_rows(jnp.concatenate([gi, ai], axis=1), 128).T         # (E+H1, NIp)

    b1_col = params["b1"].reshape(h1, 1).astype(f32)
    w2t = params["w2"].astype(f32).T                                    # (H2, H1)
    b2_col = params["b2"].reshape(h2, 1).astype(f32)
    wm_col = params["wm"].reshape(h2, 1).astype(f32) * wf1

    bf_fold = (params["bg"].astype(f32) * wf0
               + params["bm"].astype(f32) * wf1
               + params["bf"].astype(f32)).reshape(1)                   # (1,) SMEM scalar

    def row_spec():
        # Batch-tiled index row: pipelined (double-buffered) along the grid.
        return pl.BlockSpec((1, tb), lambda i: (0, i))

    def const_spec(arr):
        # Full-array block, constant index map -> stays VMEM-resident across tiles.
        return pl.BlockSpec(arr.shape, lambda i, _nd=arr.ndim: (0,) * _nd)

    in_specs = [
        row_spec(), row_spec(),
        const_spec(rhs_u), const_spec(rhs_i),
        const_spec(b1_col), const_spec(w2t), const_spec(b2_col), const_spec(wm_col),
        pl.BlockSpec(memory_space=pltpu.MemorySpace.SMEM),
    ]
    out_spec = pl.BlockSpec((1, 1, tb), lambda i: (i, 0, 0))

    out = pl.pallas_call(
        _neumf_kernel,
        grid=(num_tiles,),
        in_specs=in_specs,
        out_specs=out_spec,
        out_shape=jax.ShapeDtypeStruct((num_tiles, 1, tb), jnp.float32),
        compiler_params=pltpu.CompilerParams(
            dimension_semantics=("parallel",),      # v7x: shard batch tiles over 2 TCs
            vmem_limit_bytes=32 * 1024 * 1024,      # few MiB used; portable to v7x
        ),
    )(uidx, iidx, rhs_u, rhs_i, b1_col, w2t, b2_col, wm_col, bf_fold)

    return out.reshape(-1)[:batch]                  # matches torch .squeeze() for B > 1


# ---------------------------------------------------------------------------
# Pure-JAX reference & deterministic params
# ---------------------------------------------------------------------------
def _reference_forward(user_input, item_input, params):
    ue_g = params["gmf_user_emb"][user_input]
    ie_g = params["gmf_item_emb"][item_input]
    ue_m = params["mlp_user_emb"][user_input]
    ie_m = params["mlp_item_emb"][item_input]

    gmf = (ue_g * ie_g) @ params["wg"] + params["bg"]
    vec = jnp.concatenate([ue_m, ie_m], axis=-1)
    h1 = jnp.maximum(vec @ params["w1"] + params["b1"], 0.0)
    h2 = jnp.maximum(h1 @ params["w2"] + params["b2"], 0.0)
    mlp = h2 @ params["wm"] + params["bm"]
    cat = jnp.concatenate([gmf, mlp], axis=-1)
    z = cat @ params["wf"] + params["bf"]
    return jax.nn.sigmoid(z).squeeze(-1)


def init_params(key, n_users, n_items, emb_size, mlp_layers):
    """Deterministic synthetic parameters (linear weights stored as (in, out))."""
    ks = jax.random.split(key, 16)
    h0, h1, h2 = mlp_layers
    assert h0 == 2 * emb_size
    u = lambda k, shp, s: (jax.random.uniform(k, shp, jnp.float32) - 0.5) * 2.0 * s
    return {
        "gmf_user_emb": u(ks[0], (n_users, emb_size), 0.1),
        "gmf_item_emb": u(ks[1], (n_items, emb_size), 0.1),
        "mlp_user_emb": u(ks[2], (n_users, emb_size), 0.1),
        "mlp_item_emb": u(ks[3], (n_items, emb_size), 0.1),
        "wg": u(ks[4], (emb_size, 1), 0.2), "bg": u(ks[5], (1, 1), 0.2),
        "w1": u(ks[6], (h0, h1), 0.2),      "b1": u(ks[7], (1, h1), 0.2),
        "w2": u(ks[8], (h1, h2), 0.2),      "b2": u(ks[9], (1, h2), 0.2),
        "wm": u(ks[10], (h2, 1), 0.2),      "bm": u(ks[11], (1, 1), 0.2),
        # NOTE: PyTorch NeuMF.forward creates this Linear(2,1) freshly (randomly
        # initialized) at every call; here it is a fixed deterministic parameter.
        "wf": u(ks[12], (2, 1), 0.5),       "bf": u(ks[13], (1, 1), 0.5),
    }


if __name__ == "__main__":
    n_users, n_items = 100, 200
    emb_size = 32
    mlp_layers = [64, 32, 16]   # mlp_layers[0] == 2 * emb_size (concat width)
    batch = 8

    key = jax.random.PRNGKey(0)
    kp, ku, ki = jax.random.split(key, 3)
    params = init_params(kp, n_users, n_items, emb_size, mlp_layers)

    user_input = jax.random.randint(ku, (batch,), 0, n_users, dtype=jnp.int32)
    item_input = jax.random.randint(ki, (batch,), 0, n_items, dtype=jnp.int32)

    out = neumf_forward(user_input, item_input, params)
    out = jax.block_until_ready(out)

    ref = _reference_forward(user_input, item_input, params)
    np.testing.assert_allclose(np.asarray(out), np.asarray(ref),
                               rtol=1e-5, atol=1e-5)
    assert out.shape == (batch,)
    print("KERNEL_OK")
</pallas_src>

<mosaic_0001>
module attributes {stable_mosaic.version = 11 : i64} {
  func.func @_neumf_kernel(%arg0: i32, %arg1: memref<1x128xi32, #tpu.memory_space<vmem>>, %arg2: memref<1x128xi32, #tpu.memory_space<vmem>>, %arg3: memref<64x128xf32, #tpu.memory_space<vmem>>, %arg4: memref<64x256xf32, #tpu.memory_space<vmem>>, %arg5: memref<32x1xf32, #tpu.memory_space<vmem>>, %arg6: memref<16x32xf32, #tpu.memory_space<vmem>>, %arg7: memref<16x1xf32, #tpu.memory_space<vmem>>, %arg8: memref<16x1xf32, #tpu.memory_space<vmem>>, %arg9: memref<1xf32, #tpu.memory_space<smem>>, %arg10: memref<1x1x128xf32, #tpu.memory_space<vmem>>) attributes {dimension_semantics = [#tpu.dimension_semantics<parallel>], iteration_bounds = array<i64: 1>, scalar_prefetch = 0 : i64, scratch_operands = 0 : i64, tpu.core_type = #tpu.core_type<tc>, window_params = [{transform_indices = @transform_0, window_bounds = array<i64: 1, 128>}, {transform_indices = @transform_1, window_bounds = array<i64: 1, 128>}, {pipeline_mode = #tpu.pipeline_mode<synchronous>, transform_indices = @transform_2, window_bounds = array<i64: 64, 128>}, {pipeline_mode = #tpu.pipeline_mode<synchronous>, transform_indices = @transform_3, window_bounds = array<i64: 64, 256>}, {pipeline_mode = #tpu.pipeline_mode<synchronous>, transform_indices = @transform_4, window_bounds = array<i64: 32, 1>}, {pipeline_mode = #tpu.pipeline_mode<synchronous>, transform_indices = @transform_5, window_bounds = array<i64: 16, 32>}, {pipeline_mode = #tpu.pipeline_mode<synchronous>, transform_indices = @transform_6, window_bounds = array<i64: 16, 1>}, {pipeline_mode = #tpu.pipeline_mode<synchronous>, transform_indices = @transform_7, window_bounds = array<i64: 16, 1>}, {transform_indices = @transform_8, window_bounds = array<i64: 1>}, {transform_indices = @transform_9, window_bounds = array<i64: 1, 1, 128>}]} {
    %0 = tpu.iota {dimensions = array<i32: 0>} : vector<128x128xi32>
    %c0 = arith.constant 0 : index
    %c0_0 = arith.constant 0 : index
    %1 = vector.load %arg1[%c0, %c0_0] : memref<1x128xi32, #tpu.memory_space<vmem>>, vector<1x128xi32>
    %2 = vector.broadcast %1 : vector<1x128xi32> to vector<128x128xi32>
    %3 = arith.cmpi eq, %0, %2 : vector<128x128xi32>
    %cst = arith.constant 1.000000e+00 : f32
    %cst_1 = arith.constant 0.000000e+00 : f32
    %4 = vector.broadcast %cst : f32 to vector<128x128xf32>
    %5 = vector.broadcast %cst_1 : f32 to vector<128x128xf32>
    %6 = arith.select %3, %4, %5 : vector<128x128xi1>, vector<128x128xf32>
    %7 = tpu.iota {dimensions = array<i32: 0>} : vector<256x128xi32>
    %c0_2 = arith.constant 0 : index
    %c0_3 = arith.constant 0 : index
    %8 = vector.load %arg2[%c0_2, %c0_3] : memref<1x128xi32, #tpu.memory_space<vmem>>, vector<1x128xi32>
    %9 = vector.broadcast %8 : vector<1x128xi32> to vector<256x128xi32>
    %10 = arith.cmpi eq, %7, %9 : vector<256x128xi32>
    %cst_4 = arith.constant 1.000000e+00 : f32
    %cst_5 = arith.constant 0.000000e+00 : f32
    %11 = vector.broadcast %cst_4 : f32 to vector<256x128xf32>
    %12 = vector.broadcast %cst_5 : f32 to vector<256x128xf32>
    %13 = arith.select %10, %11, %12 : vector<256x128xi1>, vector<256x128xf32>
    %c0_6 = arith.constant 0 : index
    %c0_7 = arith.constant 0 : index
    %14 = vector.load %arg3[%c0_6, %c0_7] : memref<64x128xf32, #tpu.memory_space<vmem>>, vector<64x128xf32>
    %cst_8 = arith.constant dense<0.000000e+00> : vector<64x128xf32>
    %15 = tpu.matmul %14, %6, %cst_8 {dimension_numbers = #tpu.dot_dimension_numbers<[1], [0], [0], [1], [0, 0, 1, 1], [], []>} : vector<64x128xf32>, vector<128x128xf32>, vector<64x128xf32> -> vector<64x128xf32>
    %c0_9 = arith.constant 0 : index
    %c0_10 = arith.constant 0 : index
    %16 = vector.load %arg4[%c0_9, %c0_10] : memref<64x256xf32, #tpu.memory_space<vmem>>, vector<64x256xf32>
    %cst_11 = arith.constant dense<0.000000e+00> : vector<64x128xf32>
    %17 = tpu.matmul %16, %13, %cst_11 {dimension_numbers = #tpu.dot_dimension_numbers<[1], [0], [0], [1], [0, 0, 1, 1], [], []>} : vector<64x256xf32>, vector<256x128xf32>, vector<64x128xf32> -> vector<64x128xf32>
    %18 = vector.extract_strided_slice %15 {offsets = [0, 0], sizes = [32, 128], strides = [1, 1]} : vector<64x128xf32> to vector<32x128xf32>
    %19 = vector.extract_strided_slice %17 {offsets = [0, 0], sizes = [32, 128], strides = [1, 1]} : vector<64x128xf32> to vector<32x128xf32>
    %20 = arith.mulf %18, %19 : vector<32x128xf32>
    %21 = vector.extract_strided_slice %15 {offsets = [32, 0], sizes = [32, 128], strides = [1, 1]} : vector<64x128xf32> to vector<32x128xf32>
    %22 = vector.extract_strided_slice %17 {offsets = [32, 0], sizes = [32, 128], strides = [1, 1]} : vector<64x128xf32> to vector<32x128xf32>
    %23 = arith.addf %21, %22 : vector<32x128xf32>
    %c0_12 = arith.constant 0 : index
    %c0_13 = arith.constant 0 : index
    %24 = vector.load %arg5[%c0_12, %c0_13] : memref<32x1xf32, #tpu.memory_space<vmem>>, vector<32x1xf32>
    %25 = vector.broadcast %24 : vector<32x1xf32> to vector<32x128xf32>
    %26 = arith.addf %23, %25 : vector<32x128xf32>
    %cst_14 = arith.constant 0.000000e+00 : f32
    %27 = vector.broadcast %cst_14 : f32 to vector<32x128xf32>
    %28 = arith.maximumf %26, %27 : vector<32x128xf32>
    %c0_15 = arith.constant 0 : index
    %c0_16 = arith.constant 0 : index
    %29 = vector.load %arg6[%c0_15, %c0_16] : memref<16x32xf32, #tpu.memory_space<vmem>>, vector<16x32xf32>
    %cst_17 = arith.constant dense<0.000000e+00> : vector<16x128xf32>
    %30 = tpu.matmul %29, %28, %cst_17 {dimension_numbers = #tpu.dot_dimension_numbers<[1], [0], [0], [1], [0, 0, 1, 1], [], []>} : vector<16x32xf32>, vector<32x128xf32>, vector<16x128xf32> -> vector<16x128xf32>
    %c0_18 = arith.constant 0 : index
    %c0_19 = arith.constant 0 : index
    %31 = vector.load %arg7[%c0_18, %c0_19] : memref<16x1xf32, #tpu.memory_space<vmem>>, vector<16x1xf32>
    %32 = vector.broadcast %31 : vector<16x1xf32> to vector<16x128xf32>
    %33 = arith.addf %30, %32 : vector<16x128xf32>
    %cst_20 = arith.constant 0.000000e+00 : f32
    %34 = vector.broadcast %cst_20 : f32 to vector<16x128xf32>
    %35 = arith.maximumf %33, %34 : vector<16x128xf32>
    %cst_21 = arith.constant dense<0.000000e+00> : vector<128xf32>
    %36 = vector.multi_reduction <add>, %20, %cst_21 [0] : vector<32x128xf32> to vector<128xf32>
    %37 = vector.shape_cast %36 : vector<128xf32> to vector<1x128xf32>
    %c0_22 = arith.constant 0 : index
    %c0_23 = arith.constant 0 : index
    %38 = vector.load %arg8[%c0_22, %c0_23] : memref<16x1xf32, #tpu.memory_space<vmem>>, vector<16x1xf32>
    %39 = vector.broadcast %38 : vector<16x1xf32> to vector<16x128xf32>
    %40 = arith.mulf %35, %39 : vector<16x128xf32>
    %cst_24 = arith.constant dense<0.000000e+00> : vector<128xf32>
    %41 = vector.multi_reduction <add>, %40, %cst_24 [0] : vector<16x128xf32> to vector<128xf32>
    %42 = vector.shape_cast %41 : vector<128xf32> to vector<1x128xf32>
    %43 = arith.addf %37, %42 : vector<1x128xf32>
    %c0_25 = arith.constant 0 : index
    %44 = memref.load %arg9[%c0_25] : memref<1xf32, #tpu.memory_space<smem>>
    %45 = vector.broadcast %44 : f32 to vector<1x128xf32>
    %46 = arith.addf %43, %45 : vector<1x128xf32>
    %cst_26 = arith.constant 0.000000e+00 : f32
    %47 = vector.broadcast %cst_26 : f32 to vector<1x128xf32>
    %48 = arith.subf %47, %46 : vector<1x128xf32>
    %49 = math.exp %48 : vector<1x128xf32>
    %cst_27 = arith.constant 1.000000e+00 : f32
    %50 = vector.broadcast %cst_27 : f32 to vector<1x128xf32>
    %51 = arith.addf %50, %49 : vector<1x128xf32>
    %cst_28 = arith.constant 1.000000e+00 : f32
    %52 = vector.broadcast %cst_28 : f32 to vector<1x128xf32>
    %53 = arith.divf %52, %51 : vector<1x128xf32>
    %c0_29 = arith.constant 0 : index
    %c0_30 = arith.constant 0 : index
    %c0_31 = arith.constant 0 : index
    %54 = vector.load %arg10[%c0_29, %c0_30, %c0_31] : memref<1x1x128xf32, #tpu.memory_space<vmem>>, vector<1x1x128xf32>
    %55 = vector.shape_cast %54 : vector<1x1x128xf32> to vector<1x128xf32>
    %56 = vector.shape_cast %53 : vector<1x128xf32> to vector<1x1x128xf32>
    tpu.vector_store %arg10[%c0_29, %c0_30, %c0_31], %56 {strides = array<i32>} : memref<1x1x128xf32, #tpu.memory_space<vmem>>, vector<1x1x128xf32>,
    return
  }
  func.func @transform_0(%arg0: i32) -> (i32, i32) {
    %c0_i32 = arith.constant 0 : i32
    %c0_i32_0 = arith.constant 0 : i32
    return %c0_i32, %arg0 : i32, i32
  }
  func.func @transform_1(%arg0: i32) -> (i32, i32) {
    %c0_i32 = arith.constant 0 : i32
    %c0_i32_0 = arith.constant 0 : i32
    return %c0_i32, %arg0 : i32, i32
  }
  func.func @transform_2(%arg0: i32) -> (i32, i32) {
    %c0_i32 = arith.constant 0 : i32
    %c0_i32_0 = arith.constant 0 : i32
    %c0_i32_1 = arith.constant 0 : i32
    return %c0_i32, %c0_i32_0 : i32, i32
  }
  func.func @transform_3(%arg0: i32) -> (i32, i32) {
    %c0_i32 = arith.constant 0 : i32
    %c0_i32_0 = arith.constant 0 : i32
    %c0_i32_1 = arith.constant 0 : i32
    return %c0_i32, %c0_i32_0 : i32, i32
  }
  func.func @transform_4(%arg0: i32) -> (i32, i32) {
    %c0_i32 = arith.constant 0 : i32
    %c0_i32_0 = arith.constant 0 : i32
    %c0_i32_1 = arith.constant 0 : i32
    return %c0_i32, %c0_i32_0 : i32, i32
  }
  func.func @transform_5(%arg0: i32) -> (i32, i32) {
    %c0_i32 = arith.constant 0 : i32
    %c0_i32_0 = arith.constant 0 : i32
    %c0_i32_1 = arith.constant 0 : i32
    return %c0_i32, %c0_i32_0 : i32, i32
  }
  func.func @transform_6(%arg0: i32) -> (i32, i32) {
    %c0_i32 = arith.constant 0 : i32
    %c0_i32_0 = arith.constant 0 : i32
    %c0_i32_1 = arith.constant 0 : i32
    return %c0_i32, %c0_i32_0 : i32, i32
  }
  func.func @transform_7(%arg0: i32) -> (i32, i32) {
    %c0_i32 = arith.constant 0 : i32
    %c0_i32_0 = arith.constant 0 : i32
    %c0_i32_1 = arith.constant 0 : i32
    return %c0_i32, %c0_i32_0 : i32, i32
  }
  func.func @transform_8(%arg0: i32) -> i32 {
    %c0_i32 = arith.constant 0 : i32
    %c0_i32_0 = arith.constant 0 : i32
    return %c0_i32 : i32
  }
  func.func @transform_9(%arg0: i32) -> (i32, i32, i32) {
    %c0_i32 = arith.constant 0 : i32
    %c0_i32_0 = arith.constant 0 : i32
    %c0_i32_1 = arith.constant 0 : i32
    return %arg0, %c0_i32, %c0_i32_0 : i32, i32, i32
  }
}

</mosaic_0001>

<llo_original>
// kernel: tpu_custom_call.1
$region0: #{tpu_custom_call.1}
  #allocation0 [shape = 'u32[]', space=smem, size = 0x4, offset = 0x4, fixed_abs, tag = 'smem constant byte address 0x4 - core index']
  #allocation1 [shape = 'u32[144,128]{1,0:T(1,128)}', space=vmem, size = 0x12000, scoped, tag = 'internal scratch']
  #allocation2 [shape = 'f32[1]{0:T(128)S(6)}', space=smem, size = 0x200, scoped, tag = 'scoped memory for tpu_custom_call.1']
  %s0 = inlined_call_operand.vmem [shape: s32[1,128], index: 0, kind: input, shape index: {}]
  %s1 = inlined_call_operand.vmem [shape: s32[1,128], index: 1, kind: input, shape index: {}]
  %s2 = inlined_call_operand.vmem [shape: f32[64,128], index: 2, kind: input, shape index: {}]
  %s3 = inlined_call_operand.hbm [shape: f32[64,256], index: 3, kind: input, shape index: {}]
  %s4 = inlined_call_operand.vmem [shape: f32[32,1], index: 4, kind: input, shape index: {}]
  %s5 = inlined_call_operand.vmem [shape: f32[16,32], index: 5, kind: input, shape index: {}]
  %s6 = inlined_call_operand.vmem [shape: f32[16,1], index: 6, kind: input, shape index: {}]
  %s7 = inlined_call_operand.vmem [shape: f32[16,1], index: 7, kind: input, shape index: {}]
  %s8 = inlined_call_operand.<no memory space> [shape: f32[1], index: 8, kind: input, shape index: {}]
  %s9 = inlined_call_operand.hbm [shape: f32[1,1,128], index: 9, kind: output, shape index: {}]
  %s10 = sld [smem:[#allocation0]]
  $region50: #{tpu_custom_call.1} parent=0
    _
  %s12 = ssub.s32 1, %s10
  %s13 = scalar_select 0, %s12, %s10
  %14 = sst [smem:[#allocation2]] %s8
  $region1: #{tpu_custom_call.1} parent=0
    #allocation3 [shape = 'u8[65536]{0}', space=vmem, size = 0x10000, scoped, tag = 'input window, operand 3, single buffered']
    #allocation4 [shape = 's32[1]{0}', space=sflag, size = 0x4, scoped, tag = 'scoped memory for tpu_custom_call.1']
    #allocation5 [shape = 's32[1]{0}', space=sflag, size = 0x4, scoped, tag = 'scoped memory for tpu_custom_call.1']
    #allocation6 [shape = 'u8[512]{0}', space=vmem, size = 0x400, scoped, tag = 'output window, operand 0, single buffered']
    %15 = vsyncpa [#allocation4], 0
    %16 = vsyncpa [#allocation5], 0
    // Predicated region
    $region2: #{tpu_custom_call.1} parent=1 // pred_check
      _
    $region3: #{tpu_custom_call.1} parent=1 // pred_check_branch
      %18 = sbr.rel (0) target = $region5
    $region4: #{tpu_custom_call.1} parent=1 // pred_region
      _
    $region5: #{tpu_custom_call.1} parent=1 // pred_fallthru
      _
    // Predicated region
    $region6: #{tpu_custom_call.1} parent=1 // pred_check
      _
    $region7: #{tpu_custom_call.1} parent=1 // pred_check_branch
      %20 = sbr.rel (0) target = $region9
    $region8: #{tpu_custom_call.1} parent=1 // pred_region
      _
    $region9: #{tpu_custom_call.1} parent=1 // pred_fallthru
      _
    // Predicated region
    $region10: #{tpu_custom_call.1} parent=1 // pred_check
      _
    $region11: #{tpu_custom_call.1} parent=1 // pred_check_branch
      %22 = sbr.rel (0) target = $region13
    $region12: #{tpu_custom_call.1} parent=1 // pred_region
      _
    $region13: #{tpu_custom_call.1} parent=1 // pred_fallthru
      _
    // Predicated region
    $region14: #{tpu_custom_call.1} parent=1 // pred_check
      _
    $region15: #{tpu_custom_call.1} parent=1 // pred_check_branch
      %24 = sbr.rel (0) target = $region17
    $region16: #{tpu_custom_call.1} parent=1 // pred_region
      %s26 = ssub.s32 2048, 2048
      %27 = vsyncadd [#allocation4], %s26
      %s28 = sshll.u32 [#allocation3], 4
      %s29 = int_to_ptr.vmem [resolvable:$true] %s28
      %34 = dma.hbm_to_vmem [thread:$0]  %s3, 2048, %s29, [#allocation4], 256, 256, 16
    $region17: #{tpu_custom_call.1} parent=1 // pred_fallthru
      _
    // Predicated region
    $region18: #{tpu_custom_call.1} parent=1 // pred_check
      _
    $region19: #{tpu_custom_call.1} parent=1 // pred_check_branch
      %36 = sbr.rel (0) target = $region21
    $region20: #{tpu_custom_call.1} parent=1 // pred_region
      _
    $region21: #{tpu_custom_call.1} parent=1 // pred_fallthru
      _
    // Predicated region
    $region22: #{tpu_custom_call.1} parent=1 // pred_check
      _
    $region23: #{tpu_custom_call.1} parent=1 // pred_check_branch
      %38 = sbr.rel (0) target = $region25
    $region24: #{tpu_custom_call.1} parent=1 // pred_region
      _
    $region25: #{tpu_custom_call.1} parent=1 // pred_fallthru
      _
    // Predicated region
    $region26: #{tpu_custom_call.1} parent=1 // pred_check
      _
    $region27: #{tpu_custom_call.1} parent=1 // pred_check_branch
      %40 = sbr.rel (0) target = $region29
    $region28: #{tpu_custom_call.1} parent=1 // pred_region
      _
    $region29: #{tpu_custom_call.1} parent=1 // pred_fallthru
      _
    // Predicated region
    $region30: #{tpu_custom_call.1} parent=1 // pred_check
      _
    $region31: #{tpu_custom_call.1} parent=1 // pred_check_branch
      %42 = sbr.rel (0) target = $region33
    $region32: #{tpu_custom_call.1} parent=1 // pred_region
      _
    $region33: #{tpu_custom_call.1} parent=1 // pred_fallthru
      _
    // Predicated region
    $region34: #{tpu_custom_call.1} parent=1 // pred_check
      _
    $region35: #{tpu_custom_call.1} parent=1 // pred_check_branch
      %44 = sbr.rel (0) target = $region37
    $region36: #{tpu_custom_call.1} parent=1 // pred_region
      _
    $region37: #{tpu_custom_call.1} parent=1 // pred_fallthru
      _
    // Predicated region
    $region38: #{tpu_custom_call.1} parent=1 // pred_check
      _
    $region39: #{tpu_custom_call.1} parent=1 // pred_check_branch
      %46 = sbr.rel (0) target = $region41
    $region40: #{tpu_custom_call.1} parent=1 // pred_region
      %47 = dma.done [#allocation4], 2048
    $region41: #{tpu_custom_call.1} parent=1 // pred_fallthru
      _
    %v48 = vlaneseq
    %v49 = vshrl.u32 %v48, 7
    %v50 = vadd.s32 %v49, 8
    %v51 = vadd.s32 %v49, 16
    %v52 = vadd.s32 %v49, 24
    %v53 = vadd.s32 %v49, 32
    %v54 = vadd.s32 %v49, 40
    %v55 = vadd.s32 %v49, 48
    %v56 = vadd.s32 %v49, 56
    %v57 = vadd.s32 %v49, 64
    %v58 = vadd.s32 %v49, 72
    %v59 = vadd.s32 %v49, 80
    %v60 = vadd.s32 %v49, 88
    %v61 = vadd.s32 %v49, 96
    %v62 = vadd.s32 %v49, 104
    %v63 = vadd.s32 %v49, 112
    %v64 = vadd.s32 %v49, 120
    %v65 = vld [vmem:[%s0] sm:$0x1]
    %v66 = vlaneseq
    %v67 = vshrl.u32 %v66, 7
    %v68 = vsub.s32 0, %v67
    %v69 = vrot.slane %v65, %v68
    %vm70 = vcmp.eq.s32.totalorder %v49, %v69
    %vm71 = vcmp.eq.s32.totalorder %v50, %v69
    %vm72 = vcmp.eq.s32.totalorder %v51, %v69
    %vm73 = vcmp.eq.s32.totalorder %v52, %v69
    %vm74 = vcmp.eq.s32.totalorder %v53, %v69
    %vm75 = vcmp.eq.s32.totalorder %v54, %v69
    %vm76 = vcmp.eq.s32.totalorder %v55, %v69
    %vm77 = vcmp.eq.s32.totalorder %v56, %v69
    %vm78 = vcmp.eq.s32.totalorder %v57, %v69
    %vm79 = vcmp.eq.s32.totalorder %v58, %v69
    %vm80 = vcmp.eq.s32.totalorder %v59, %v69
    %vm81 = vcmp.eq.s32.totalorder %v60, %v69
    %vm82 = vcmp.eq.s32.totalorder %v61, %v69
    %vm83 = vcmp.eq.s32.totalorder %v62, %v69
    %vm84 = vcmp.eq.s32.totalorder %v63, %v69
    %vm85 = vcmp.eq.s32.totalorder %v64, %v69
    %v86 = vsel %vm70, 1.0, 0.0
    %v87 = vsel %vm71, 1.0, 0.0
    %v88 = vsel %vm72, 1.0, 0.0
    %v89 = vsel %vm73, 1.0, 0.0
    %v90 = vsel %vm74, 1.0, 0.0
    %v91 = vsel %vm75, 1.0, 0.0
    %v92 = vsel %vm76, 1.0, 0.0
    %v93 = vsel %vm77, 1.0, 0.0
    %v94 = vsel %vm78, 1.0, 0.0
    %v95 = vsel %vm79, 1.0, 0.0
    %v96 = vsel %vm80, 1.0, 0.0
    %v97 = vsel %vm81, 1.0, 0.0
    %v98 = vsel %vm82, 1.0, 0.0
    %v99 = vsel %vm83, 1.0, 0.0
    %v100 = vsel %vm84, 1.0, 0.0
    %v101 = vsel %vm85, 1.0, 0.0
    %v102 = vadd.s32 %v49, 128
    %v103 = vadd.s32 %v49, 136
    %v104 = vadd.s32 %v49, 144
    %v105 = vadd.s32 %v49, 152
    %v106 = vadd.s32 %v49, 160
    %v107 = vadd.s32 %v49, 168
    %v108 = vadd.s32 %v49, 176
    %v109 = vadd.s32 %v49, 184
    %v110 = vadd.s32 %v49, 192
    %v111 = vadd.s32 %v49, 200
    %v112 = vadd.s32 %v49, 208
    %v113 = vadd.s32 %v49, 216
    %v114 = vadd.s32 %v49, 224
    %v115 = vadd.s32 %v49, 232
    %v116 = vadd.s32 %v49, 240
    %v117 = vadd.s32 %v49, 248
    %v118 = vld [vmem:[%s1] sm:$0x1]
    %v119 = vlaneseq
    %v120 = vshrl.u32 %v119, 7
    %v121 = vsub.s32 0, %v120
    %v122 = vrot.slane %v118, %v121
    %vm123 = vcmp.eq.s32.totalorder %v49, %v122
    %vm124 = vcmp.eq.s32.totalorder %v50, %v122
    %vm125 = vcmp.eq.s32.totalorder %v51, %v122
    %vm126 = vcmp.eq.s32.totalorder %v52, %v122
    %vm127 = vcmp.eq.s32.totalorder %v53, %v122
    %vm128 = vcmp.eq.s32.totalorder %v54, %v122
    %vm129 = vcmp.eq.s32.totalorder %v55, %v122
    %vm130 = vcmp.eq.s32.totalorder %v56, %v122
    %vm131 = vcmp.eq.s32.totalorder %v57, %v122
    %vm132 = vcmp.eq.s32.totalorder %v58, %v122
    %vm133 = vcmp.eq.s32.totalorder %v59, %v122
    %vm134 = vcmp.eq.s32.totalorder %v60, %v122
    %vm135 = vcmp.eq.s32.totalorder %v61, %v122
    %vm136 = vcmp.eq.s32.totalorder %v62, %v122
    %vm137 = vcmp.eq.s32.totalorder %v63, %v122
    %vm138 = vcmp.eq.s32.totalorder %v64, %v122
    %vm139 = vcmp.eq.s32.totalorder %v102, %v122
    %vm140 = vcmp.eq.s32.totalorder %v103, %v122
    %vm141 = vcmp.eq.s32.totalorder %v104, %v122
    %vm142 = vcmp.eq.s32.totalorder %v105, %v122
    %vm143 = vcmp.eq.s32.totalorder %v106, %v122
    %vm144 = vcmp.eq.s32.totalorder %v107, %v122
    %vm145 = vcmp.eq.s32.totalorder %v108, %v122
    %vm146 = vcmp.eq.s32.totalorder %v109, %v122
    %vm147 = vcmp.eq.s32.totalorder %v110, %v122
    %vm148 = vcmp.eq.s32.totalorder %v111, %v122
    %vm149 = vcmp.eq.s32.totalorder %v112, %v122
    %vm150 = vcmp.eq.s32.totalorder %v113, %v122
    %vm151 = vcmp.eq.s32.totalorder %v114, %v122
    %vm152 = vcmp.eq.s32.totalorder %v115, %v122
    %vm153 = vcmp.eq.s32.totalorder %v116, %v122
    %vm154 = vcmp.eq.s32.totalorder %v117, %v122
    %v155 = vsel %vm123, 1.0, 0.0
    %v156 = vsel %vm124, 1.0, 0.0
    %v157 = vsel %vm125, 1.0, 0.0
    %v158 = vsel %vm126, 1.0, 0.0
    %v159 = vsel %vm127, 1.0, 0.0
    %v160 = vsel %vm128, 1.0, 0.0
    %v161 = vsel %vm129, 1.0, 0.0
    %v162 = vsel %vm130, 1.0, 0.0
    %v163 = vsel %vm131, 1.0, 0.0
    %v164 = vsel %vm132, 1.0, 0.0
    %v165 = vsel %vm133, 1.0, 0.0
    %v166 = vsel %vm134, 1.0, 0.0
    %v167 = vsel %vm135, 1.0, 0.0
    %v168 = vsel %vm136, 1.0, 0.0
    %v169 = vsel %vm137, 1.0, 0.0
    %v170 = vsel %vm138, 1.0, 0.0
    %v171 = vsel %vm139, 1.0, 0.0
    %v172 = vsel %vm140, 1.0, 0.0
    %v173 = vsel %vm141, 1.0, 0.0
    %v174 = vsel %vm142, 1.0, 0.0
    %v175 = vsel %vm143, 1.0, 0.0
    %v176 = vsel %vm144, 1.0, 0.0
    %v177 = vsel %vm145, 1.0, 0.0
    %v178 = vsel %vm146, 1.0, 0.0
    %v179 = vsel %vm147, 1.0, 0.0
    %v180 = vsel %vm148, 1.0, 0.0
    %v181 = vsel %vm149, 1.0, 0.0
    %v182 = vsel %vm150, 1.0, 0.0
    %v183 = vsel %vm151, 1.0, 0.0
    %v184 = vsel %vm152, 1.0, 0.0
    %v185 = vsel %vm153, 1.0, 0.0
    %v186 = vsel %vm154, 1.0, 0.0
    %v187 = vld [vmem:[%s2] sm:$0xff]
    %v188 = vld [vmem:[%s2 + $0x8] sm:$0xff]
    %v189 = vld [vmem:[%s2 + $0x10] sm:$0xff]
    %v190 = vld [vmem:[%s2 + $0x18] sm:$0xff]
    %v191 = vld [vmem:[%s2 + $0x20] sm:$0xff]
    %v192 = vld [vmem:[%s2 + $0x28] sm:$0xff]
    %v193 = vld [vmem:[%s2 + $0x30] sm:$0xff]
    %v194 = vld [vmem:[%s2 + $0x38] sm:$0xff]
    %195 = vmatprep.subr.mxu0 0.0
    %196 = vmatpush1.msra.mxu0 %v86
    %197 = vmatprep.subr.mxu0 0.0
    %198 = vmatpush1.msra.mxu0 %v87
    %199 = vmatprep.subr.mxu0 0.0
    %200 = vmatpush1.msra.mxu0 %v88
    %201 = vmatprep.subr.mxu0 0.0
    %202 = vmatpush1.msra.mxu0 %v89
    %203 = vmatprep.subr.mxu0 0.0
    %204 = vmatpush1.msra.mxu0 %v90
    %205 = vmatprep.subr.mxu0 0.0
    %206 = vmatpush1.msra.mxu0 %v91
    %207 = vmatprep.subr.mxu0 0.0
    %208 = vmatpush1.msra.mxu0 %v92
    %209 = vmatprep.subr.mxu0 0.0
    %210 = vmatpush1.msra.mxu0 %v93
    %211 = vmatprep.subr.mxu0 0.0
    %212 = vmatpush1.msra.mxu0 %v94
    %213 = vmatprep.subr.mxu0 0.0
    %214 = vmatpush1.msra.mxu0 %v95
    %215 = vmatprep.subr.mxu0 0.0
    %216 = vmatpush1.msra.mxu0 %v96
    %217 = vmatprep.subr.mxu0 0.0
    %218 = vmatpush1.msra.mxu0 %v97
    %219 = vmatprep.subr.mxu0 0.0
    %220 = vmatpush1.msra.mxu0 %v98
    %221 = vmatprep.subr.mxu0 0.0
    %222 = vmatpush1.msra.mxu0 %v99
    %223 = vmatprep.subr.mxu0 0.0
    %224 = vmatpush1.msra.mxu0 %v100
    %225 = vmatprep.subr.mxu0 0.0
    %226 = vmatpush1.msra.mxu0 %v101
    %227 = vmatprep.subr.mxu0 0.0
    %228 = vmatpush1.msra.mxu0 0.0
    %229 = vmatprep.subr.mxu0 0.0
    %230 = vmatpush1.msra.mxu0 0.0
    %231 = vmatprep.subr.mxu0 0.0
    %232 = vmatpush1.msra.mxu0 0.0
    %233 = vmatprep.subr.mxu0 0.0
    %234 = vmatpush1.msra.mxu0 0.0
    %235 = vmatprep.subr.mxu0 0.0
    %236 = vmatpush1.msra.mxu0 0.0
    %237 = vmatprep.subr.mxu0 0.0
    %238 = vmatpush1.msra.mxu0 0.0
    %239 = vmatprep.subr.mxu0 0.0
    %240 = vmatpush1.msra.mxu0 0.0
    %241 = vmatprep.subr.mxu0 0.0
    %242 = vmatpush1.msra.mxu0 0.0
    %243 = vmatprep.subr.mxu0 0.0
    %244 = vmatpush1.msra.mxu0 0.0
    %245 = vmatprep.subr.mxu0 0.0
    %246 = vmatpush1.msra.mxu0 0.0
    %247 = vmatprep.subr.mxu0 0.0
    %248 = vmatpush1.msra.mxu0 0.0
    %249 = vmatprep.subr.mxu0 0.0
    %250 = vmatpush1.msra.mxu0 0.0
    %251 = vmatprep.subr.mxu0 0.0
    %252 = vmatpush1.msra.mxu0 0.0
    %253 = vmatprep.subr.mxu0 0.0
    %254 = vmatpush1.msra.mxu0 0.0
    %255 = vmatprep.subr.mxu0 0.0
    %256 = vmatpush1.msra.mxu0 0.0
    %257 = vmatprep.subr.mxu0 0.0
    %258 = vmatpush1.msra.mxu0 0.0
    %259 = vmatprep.mubr.f32.mxu0 0.0
    %260 = vmatmul.mubr.f32.gmra.mrb[0].mxu0 %v187
    %v261 = vpop.f32.mrb[0].mxu0
    %v262 = vadd.f32 0.0, %v261
    %v263 = vpop.f32.mrb[0].mxu0
    %264 = vmatprep.mubr.f32.mxu0 0.0
    %265 = vmatmul.mubr.f32.gmra.mrb[0].mxu0 %v188
    %v266 = vpop.f32.mrb[0].mxu0
    %v267 = vadd.f32 0.0, %v266
    %v268 = vpop.f32.mrb[0].mxu0
    %269 = vmatprep.mubr.f32.mxu0 0.0
    %270 = vmatmul.mubr.f32.gmra.mrb[0].mxu0 %v189
    %v271 = vpop.f32.mrb[0].mxu0
    %v272 = vadd.f32 0.0, %v271
    %v273 = vpop.f32.mrb[0].mxu0
    %274 = vmatprep.mubr.f32.mxu0 0.0
    %275 = vmatmul.mubr.f32.gmra.mrb[0].mxu0 %v190
    %v276 = vpop.f32.mrb[0].mxu0
    %v277 = vadd.f32 0.0, %v276
    %v278 = vpop.f32.mrb[0].mxu0
    %279 = vmatprep.mubr.f32.mxu0 0.0
    %280 = vmatmul.mubr.f32.gmra.mrb[0].mxu0 %v191
    %v281 = vpop.f32.mrb[0].mxu0
    %v282 = vadd.f32 0.0, %v281
    %v283 = vpop.f32.mrb[0].mxu0
    %284 = vmatprep.mubr.f32.mxu0 0.0
    %285 = vmatmul.mubr.f32.gmra.mrb[0].mxu0 %v192
    %v286 = vpop.f32.mrb[0].mxu0
    %v287 = vadd.f32 0.0, %v286
    %v288 = vpop.f32.mrb[0].mxu0
    %289 = vmatprep.mubr.f32.mxu0 0.0
    %290 = vmatmul.mubr.f32.gmra.mrb[0].mxu0 %v193
    %v291 = vpop.f32.mrb[0].mxu0
    %v292 = vadd.f32 0.0, %v291
    %v293 = vpop.f32.mrb[0].mxu0
    %294 = vmatprep.mubr.f32.mxu0 0.0
    %295 = vmatmul.mubr.f32.gmra.mrb[0].mxu0 %v194
    %v296 = vpop.f32.mrb[0].mxu0
    %v297 = vadd.f32 0.0, %v296
    %v298 = vpop.f32.mrb[0].mxu0
    %299 = vdwg.mxu0
    %v300 = vld [vmem:[#allocation3] sm:$0xff]
    %v301 = vld [vmem:[#allocation3 + $0x8] sm:$0xff]
    %v302 = vld [vmem:[#allocation3 + $0x10] sm:$0xff]
    %v303 = vld [vmem:[#allocation3 + $0x18] sm:$0xff]
    %v304 = vld [vmem:[#allocation3 + $0x20] sm:$0xff]
    %v305 = vld [vmem:[#allocation3 + $0x28] sm:$0xff]
    %v306 = vld [vmem:[#allocation3 + $0x30] sm:$0xff]
    %v307 = vld [vmem:[#allocation3 + $0x38] sm:$0xff]
    %v308 = vld [vmem:[#allocation3 + $0x40] sm:$0xff]
    %v309 = vld [vmem:[#allocation3 + $0x48] sm:$0xff]
    %v310 = vld [vmem:[#allocation3 + $0x50] sm:$0xff]
    %v311 = vld [vmem:[#allocation3 + $0x58] sm:$0xff]
    %v312 = vld [vmem:[#allocation3 + $0x60] sm:$0xff]
    %v313 = vld [vmem:[#allocation3 + $0x68] sm:$0xff]
    %v314 = vld [vmem:[#allocation3 + $0x70] sm:$0xff]
    %v315 = vld [vmem:[#allocation3 + $0x78] sm:$0xff]
    %316 = vmatprep.subr.mxu0 0.0
    %317 = vmatpush1.msra.mxu0 %v155
    %318 = vmatprep.subr.mxu0 0.0
    %319 = vmatpush1.msra.mxu0 %v156
    %320 = vmatprep.subr.mxu0 0.0
    %321 = vmatpush1.msra.mxu0 %v157
    %322 = vmatprep.subr.mxu0 0.0
    %323 = vmatpush1.msra.mxu0 %v158
    %324 = vmatprep.subr.mxu0 0.0
    %325 = vmatpush1.msra.mxu0 %v159
    %326 = vmatprep.subr.mxu0 0.0
    %327 = vmatpush1.msra.mxu0 %v160
    %328 = vmatprep.subr.mxu0 0.0
    %329 = vmatpush1.msra.mxu0 %v161
    %330 = vmatprep.subr.mxu0 0.0
    %331 = vmatpush1.msra.mxu0 %v162
    %332 = vmatprep.subr.mxu0 0.0
    %333 = vmatpush1.msra.mxu0 %v163
    %334 = vmatprep.subr.mxu0 0.0
    %335 = vmatpush1.msra.mxu0 %v164
    %336 = vmatprep.subr.mxu0 0.0
    %337 = vmatpush1.msra.mxu0 %v165
    %338 = vmatprep.subr.mxu0 0.0
    %339 = vmatpush1.msra.mxu0 %v166
    %340 = vmatprep.subr.mxu0 0.0
    %341 = vmatpush1.msra.mxu0 %v167
    %342 = vmatprep.subr.mxu0 0.0
    %343 = vmatpush1.msra.mxu0 %v168
    %344 = vmatprep.subr.mxu0 0.0
    %345 = vmatpush1.msra.mxu0 %v169
    %346 = vmatprep.subr.mxu0 0.0
    %347 = vmatpush1.msra.mxu0 %v170
    %348 = vmatprep.subr.mxu0 0.0
    %349 = vmatpush1.msra.mxu0 %v171
    %350 = vmatprep.subr.mxu0 0.0
    %351 = vmatpush1.msra.mxu0 %v172
    %352 = vmatprep.subr.mxu0 0.0
    %353 = vmatpush1.msra.mxu0 %v173
    %354 = vmatprep.subr.mxu0 0.0
    %355 = vmatpush1.msra.mxu0 %v174
    %356 = vmatprep.subr.mxu0 0.0
    %357 = vmatpush1.msra.mxu0 %v175
    %358 = vmatprep.subr.mxu0 0.0
    %359 = vmatpush1.msra.mxu0 %v176
    %360 = vmatprep.subr.mxu0 0.0
    %361 = vmatpush1.msra.mxu0 %v177
    %362 = vmatprep.subr.mxu0 0.0
    %363 = vmatpush1.msra.mxu0 %v178
    %364 = vmatprep.subr.mxu0 0.0
    %365 = vmatpush1.msra.mxu0 %v179
    %366 = vmatprep.subr.mxu0 0.0
    %367 = vmatpush1.msra.mxu0 %v180
    %368 = vmatprep.subr.mxu0 0.0
    %369 = vmatpush1.msra.mxu0 %v181
    %370 = vmatprep.subr.mxu0 0.0
    %371 = vmatpush1.msra.mxu0 %v182
    %372 = vmatprep.subr.mxu0 0.0
    %373 = vmatpush1.msra.mxu0 %v183
    %374 = vmatprep.subr.mxu0 0.0
    %375 = vmatpush1.msra.mxu0 %v184
    %376 = vmatprep.subr.mxu0 0.0
    %377 = vmatpush1.msra.mxu0 %v185
    %378 = vmatprep.subr.mxu0 0.0
    %379 = vmatpush1.msra.mxu0 %v186
    %380 = vmatprep.mubr.f32.mxu0 %v301
    %381 = vmatmul.mubr.f32.gmra.mrb[0].mxu0 %v300
    %v382 = vpop.f32.mrb[0].mxu0
    %v383 = vadd.f32 0.0, %v382
    %v384 = vpop.f32.mrb[0].mxu0
    %385 = vmatprep.mubr.f32.mxu0 %v303
    %386 = vmatmul.mubr.f32.gmra.mrb[0].mxu0 %v302
    %v387 = vpop.f32.mrb[0].mxu0
    %v388 = vadd.f32 0.0, %v387
    %v389 = vpop.f32.mrb[0].mxu0
    %390 = vmatprep.mubr.f32.mxu0 %v305
    %391 = vmatmul.mubr.f32.gmra.mrb[0].mxu0 %v304
    %v392 = vpop.f32.mrb[0].mxu0
    %v393 = vadd.f32 0.0, %v392
    %v394 = vpop.f32.mrb[0].mxu0
    %395 = vmatprep.mubr.f32.mxu0 %v307
    %396 = vmatmul.mubr.f32.gmra.mrb[0].mxu0 %v306
    %v397 = vpop.f32.mrb[0].mxu0
    %v398 = vadd.f32 0.0, %v397
    %v399 = vpop.f32.mrb[0].mxu0
    %400 = vmatprep.mubr.f32.mxu0 %v309
    %401 = vmatmul.mubr.f32.gmra.mrb[0].mxu0 %v308
    %v402 = vpop.f32.mrb[0].mxu0
    %v403 = vadd.f32 0.0, %v402
    %v404 = vpop.f32.mrb[0].mxu0
    %405 = vmatprep.mubr.f32.mxu0 %v311
    %406 = vmatmul.mubr.f32.gmra.mrb[0].mxu0 %v310
    %v407 = vpop.f32.mrb[0].mxu0
    %v408 = vadd.f32 0.0, %v407
    %v409 = vpop.f32.mrb[0].mxu0
    %410 = vmatprep.mubr.f32.mxu0 %v313
    %411 = vmatmul.mubr.f32.gmra.mrb[0].mxu0 %v312
    %v412 = vpop.f32.mrb[0].mxu0
    %v413 = vadd.f32 0.0, %v412
    %v414 = vpop.f32.mrb[0].mxu0
    %415 = vmatprep.mubr.f32.mxu0 %v315
    %416 = vmatmul.mubr.f32.gmra.mrb[0].mxu0 %v314
    %v417 = vpop.f32.mrb[0].mxu0
    %v418 = vadd.f32 0.0, %v417
    %v419 = vpop.f32.mrb[0].mxu0
    %420 = vdwg.mxu0
    %v421 = vmul.f32 %v262, %v383
    %v422 = vmul.f32 %v267, %v388
    %v423 = vmul.f32 %v272, %v393
    %v424 = vmul.f32 %v277, %v398
    %v425 = vadd.f32 %v282, %v403
    %v426 = vadd.f32 %v287, %v408
    %v427 = vadd.f32 %v292, %v413
    %v428 = vadd.f32 %v297, %v418
    %v429 = vld [vmem:[%s4] sm:$0xff]
    %v430 = vld [vmem:[%s4 + $0x8] sm:$0xff]
    %v431 = vld [vmem:[%s4 + $0x10] sm:$0xff]
    %v432 = vld [vmem:[%s4 + $0x18] sm:$0xff]
    %434 = vset.pattern.permute.xlu0 0
    %435 = vperm.xlu0 %434, %v429
    %v436 = vpop.permute.xlu0 %435
    %439 = vset.pattern.permute.xlu0 0
    %440 = vperm.xlu0 %439, %v430
    %v441 = vpop.permute.xlu0 %440
    %444 = vset.pattern.permute.xlu0 0
    %445 = vperm.xlu0 %444, %v431
    %v446 = vpop.permute.xlu0 %445
    %449 = vset.pattern.permute.xlu0 0
    %450 = vperm.xlu0 %449, %v432
    %v451 = vpop.permute.xlu0 %450
    %v453 = vadd.f32 %v425, %v436
    %v454 = vadd.f32 %v426, %v441
    %v455 = vadd.f32 %v427, %v446
    %v456 = vadd.f32 %v428, %v451
    %v457 = vmax.f32 %v453, 0.0
    %v458 = vmax.f32 %v454, 0.0
    %v459 = vmax.f32 %v455, 0.0
    %v460 = vmax.f32 %v456, 0.0
    %v461 = vld [vmem:[%s5] sm:$0xff]
    %v462 = vld [vmem:[%s5 + $0x8] sm:$0xff]
    %v463 = vld [vmem:[%s6] sm:$0xff]
    %v464 = vld [vmem:[%s6 + $0x8] sm:$0xff]
    %466 = vset.pattern.permute.xlu0 0
    %467 = vperm.xlu0 %466, %v463
    %v468 = vpop.permute.xlu0 %467
    %471 = vset.pattern.permute.xlu0 0
    %472 = vperm.xlu0 %471, %v464
    %v473 = vpop.permute.xlu0 %472
    %vm475 = vcmask 261120
    %v477 = vsel %vm475, %v461, 0
    %v480 = vsel %vm475, %v462, 0
    %482 = vmatprep.subr.mxu0 0.0
    %483 = vmatpush1.msra.mxu0 %v457
    %484 = vmatprep.subr.mxu0 0.0
    %485 = vmatpush1.msra.mxu0 %v458
    %486 = vmatprep.subr.mxu0 0.0
    %487 = vmatpush1.msra.mxu0 %v459
    %488 = vmatprep.subr.mxu0 0.0
    %489 = vmatpush1.msra.mxu0 %v460
    %490 = vmatprep.subr.mxu0 0.0
    %491 = vmatpush1.msra.mxu0 0.0
    %492 = vmatprep.subr.mxu0 0.0
    %493 = vmatpush1.msra.mxu0 0.0
    %494 = vmatprep.subr.mxu0 0.0
    %495 = vmatpush1.msra.mxu0 0.0
    %496 = vmatprep.subr.mxu0 0.0
    %497 = vmatpush1.msra.mxu0 0.0
    %498 = vmatprep.subr.mxu0 0.0
    %499 = vmatpush1.msra.mxu0 0.0
    %500 = vmatprep.subr.mxu0 0.0
    %501 = vmatpush1.msra.mxu0 0.0
    %502 = vmatprep.subr.mxu0 0.0
    %503 = vmatpush1.msra.mxu0 0.0
    %504 = vmatprep.subr.mxu0 0.0
    %505 = vmatpush1.msra.mxu0 0.0
    %506 = vmatprep.subr.mxu0 0.0
    %507 = vmatpush1.msra.mxu0 0.0
    %508 = vmatprep.subr.mxu0 0.0
    %509 = vmatpush1.msra.mxu0 0.0
    %510 = vmatprep.subr.mxu0 0.0
    %511 = vmatpush1.msra.mxu0 0.0
    %512 = vmatprep.subr.mxu0 0.0
    %513 = vmatpush1.msra.mxu0 0.0
    %514 = vmatprep.subr.mxu0 0.0
    %515 = vmatpush1.msra.mxu0 0.0
    %516 = vmatprep.subr.mxu0 0.0
    %517 = vmatpush1.msra.mxu0 0.0
    %518 = vmatprep.subr.mxu0 0.0
    %519 = vmatpush1.msra.mxu0 0.0
    %520 = vmatprep.subr.mxu0 0.0
    %521 = vmatpush1.msra.mxu0 0.0
    %522 = vmatprep.subr.mxu0 0.0
    %523 = vmatpush1.msra.mxu0 0.0
    %524 = vmatprep.subr.mxu0 0.0
    %525 = vmatpush1.msra.mxu0 0.0
    %526 = vmatprep.subr.mxu0 0.0
    %527 = vmatpush1.msra.mxu0 0.0
    %528 = vmatprep.subr.mxu0 0.0
    %529 = vmatpush1.msra.mxu0 0.0
    %530 = vmatprep.subr.mxu0 0.0
    %531 = vmatpush1.msra.mxu0 0.0
    %532 = vmatprep.subr.mxu0 0.0
    %533 = vmatpush1.msra.mxu0 0.0
    %534 = vmatprep.subr.mxu0 0.0
    %535 = vmatpush1.msra.mxu0 0.0
    %536 = vmatprep.subr.mxu0 0.0
    %537 = vmatpush1.msra.mxu0 0.0
    %538 = vmatprep.subr.mxu0 0.0
    %539 = vmatpush1.msra.mxu0 0.0
    %540 = vmatprep.subr.mxu0 0.0
    %541 = vmatpush1.msra.mxu0 0.0
    %542 = vmatprep.subr.mxu0 0.0
    %543 = vmatpush1.msra.mxu0 0.0
    %544 = vmatprep.subr.mxu0 0.0
    %545 = vmatpush1.msra.mxu0 0.0
    %546 = vmatprep.mubr.f32.mxu0 0.0
    %547 = vmatmul.mubr.f32.gmra.mrb[0].mxu0 %v477
    %v548 = vpop.f32.mrb[0].mxu0
    %v549 = vadd.f32 %v468, %v548
    %v550 = vpop.f32.mrb[0].mxu0
    %551 = vmatprep.mubr.f32.mxu0 0.0
    %552 = vmatmul.mubr.f32.gmra.mrb[0].mxu0 %v480
    %v553 = vpop.f32.mrb[0].mxu0
    %v554 = vadd.f32 %v473, %v553
    %v555 = vpop.f32.mrb[0].mxu0
    %556 = vdwg.mxu0
    %v557 = vmax.f32 %v549, 0.0
    %v558 = vmax.f32 %v554, 0.0
    %v559 = vadd.f32 %v421, %v422
    %v560 = vadd.f32 %v559, %v423
    %v561 = vadd.f32 %v560, %v424
    %v562 = vrot.slane %v561, 4
    %v563 = vadd.f32 %v561, %v562
    %v564 = vrot.slane %v563, 2
    %v565 = vadd.f32 %v563, %v564
    %v566 = vrot.slane %v565, 1
    %v567 = vadd.f32 %v565, %v566
    %v568 = vld [vmem:[%s7] sm:$0xff]
    %v569 = vld [vmem:[%s7 + $0x8] sm:$0xff]
    %571 = vset.pattern.permute.xlu0 0
    %572 = vperm.xlu0 %571, %v568
    %v573 = vpop.permute.xlu0 %572
    %576 = vset.pattern.permute.xlu0 0
    %577 = vperm.xlu0 %576, %v569
    %v578 = vpop.permute.xlu0 %577
    %v580 = vmul.f32 %v557, %v573
    %v581 = vmul.f32 %v558, %v578
    %v582 = vadd.f32 %v580, %v581
    %v583 = vrot.slane %v582, 4
    %v584 = vadd.f32 %v582, %v583
    %v585 = vrot.slane %v584, 2
    %v586 = vadd.f32 %v584, %v585
    %v587 = vrot.slane %v586, 1
    %v588 = vadd.f32 %v586, %v587
    %v589 = vadd.f32 %v567, %v588
    %s590 = sld [smem:[#allocation2]]
    %v591 = vstv %s590
    %v592 = vadd.f32 %v589, %v591
    %v593 = vsub.f32 0.0, %v592
    %v594 = vmul.f32 %v593, 1.442695
    %v595 = vpow.pop %v594
    %v596 = vadd.f32 %v595, 1.0
    %v597 = vrcp.pop %v596
    %v598 = vmul.f32 1.0, %v597
    %599 = vst [vmem:[#allocation6] sm:$0x1] %v598
    // Predicated region
    $region42: #{tpu_custom_call.1} parent=1 // pred_check
      _
    $region43: #{tpu_custom_call.1} parent=1 // pred_check_branch
      %601 = sbr.rel (0) target = $region45
    $region44: #{tpu_custom_call.1} parent=1 // pred_region
      %s603 = ssub.s32 16, 16
      %604 = vsyncadd [#allocation5], %s603
      %s606 = sshll.u32 [#allocation6], 4
      %s607 = int_to_ptr.vmem [resolvable:$true] %s606
      %609 = dma.vmem_to_hbm [thread:$0]  %s607, 16, %s9, [#allocation5]
    $region45: #{tpu_custom_call.1} parent=1 // pred_fallthru
      _
    // Predicated region
    $region46: #{tpu_custom_call.1} parent=1 // pred_check
      _
    $region47: #{tpu_custom_call.1} parent=1 // pred_check_branch
      %611 = sbr.rel (0) target = $region49
    $region48: #{tpu_custom_call.1} parent=1 // pred_region
      %612 = dma.done [#allocation5], 16
    $region49: #{tpu_custom_call.1} parent=1 // pred_fallthru
      _
    %613 = vsyncpa [#allocation4], 1
    %614 = vsyncpa [#allocation5], 1

</llo_original>
